<compile_context>
chip_gen: v7x
topology: tpu7x:2x2x1
jax: 0.10.0
libtpu: 0.0.40
codegen_flags: <defaults>
</compile_context>

<pallas_src>
import functools

import numpy as np
import jax
import jax.numpy as jnp
from jax import lax
from jax.experimental import pallas as pl
from jax.experimental.pallas import tpu as pltpu

LANE = 128
SUBLANE = 8
SUB_ROWS = 8                  # sublane band: one (8,128) f32 vreg per array
MAX_TILE_ROWS = 2048          # (2048,128) f32 block = 1 MiB


def _round_up(x, m):
    return ((x + m - 1) // m) * m


def _med_kernel(starts_ref, sb_lo_ref, sb_hi_ref, gs0_ref, g1_ref,   # SMEM (small)
                a_ref, vpd_ref,                                      # VMEM (tile_rows, 128)
                out_ref,                                             # VMEM (tile_rows, 128)
                *, subs_per_tile, coef, vpd_scale):
    i = pl.program_id(0)
    row = lax.broadcasted_iota(jnp.int32, (SUB_ROWS, LANE), 0)
    col = lax.broadcasted_iota(jnp.int32, (SUB_ROWS, LANE), 1)

    @pl.loop(0, subs_per_tile)
    def _(s):
        r0 = pl.multiple_of(s * SUB_ROWS, SUB_ROWS)
        gsb = i * subs_per_tile + s                      # global sub-block id
        base = gsb * (SUB_ROWS * LANE)
        idx = base + row * LANE + col                    # flat obs index per element

        a = a_ref[pl.ds(r0, SUB_ROWS), :]
        vpd = vpd_ref[pl.ds(r0, SUB_ROWS), :]
        ac = a * coef                                    # 1.6 * A / Ca
        # rsqrt on EUP; clamp keeps padded zeros finite (padded outputs are discarded).
        t = lax.rsqrt(jnp.maximum(vpd * vpd_scale, 1e-30)) * ac

        c_lo = sb_lo_ref[gsb]
        c_hi = sb_hi_ref[gsb]

        # First overlapping curve always starts at/before this band -> unconditional.
        acc0 = gs0_ref[c_lo] + g1_ref[c_lo] * t

        # Remaining curves in increasing order: single compare, last-write-wins.
        def body(k, acc):
            c = c_lo + 1 + k
            return jnp.where(idx >= starts_ref[c], gs0_ref[c] + g1_ref[c] * t, acc)

        acc = lax.fori_loop(0, c_hi - c_lo, body, acc0)
        out_ref[pl.ds(r0, SUB_ROWS), :] = acc + ac


def med_forward(gs0, g1, lengths, A, VPD, Ca=400.0, tile_rows=None):
    """Pallas-backed MED forward.

    gs0, g1  : (num,) f32 per-curve parameters
    lengths  : python tuple/list of ints (static), sum == N
    A, VPD   : (N,) f32 per-observation data (VPD > 0)
    returns gs : (N,) f32
    """
    lengths = np.asarray(lengths, dtype=np.int64)
    num = int(gs0.shape[0])
    assert lengths.shape[0] == num
    N = int(lengths.sum())
    assert int(A.shape[0]) == N and int(VPD.shape[0]) == N

    # Static curve boundaries (element offsets into the flat obs axis).
    starts_np = np.zeros(num + 1, dtype=np.int32)
    starts_np[1:] = np.cumsum(lengths)

    # Tile geometry: lane-dense rows of 128, sublane-aligned row tiles.
    R = max(1, -(-N // LANE))
    if tile_rows is None:
        # Target >= ~4 grid steps (keeps both v7x TCs busy) up to MAX_TILE_ROWS.
        tile_rows = min(MAX_TILE_ROWS, max(SUBLANE, _round_up(-(-R // 4), SUBLANE)))
    tile_rows = max(SUBLANE, _round_up(int(tile_rows), SUBLANE))
    R_pad = _round_up(R, tile_rows)
    n_tiles = R_pad // tile_rows
    n_pad = R_pad * LANE
    subs_per_tile = tile_rows // SUB_ROWS
    n_sub = R_pad // SUB_ROWS

    # Per-(8-row sub-block) range of overlapping curves (static, numpy).
    sub_obs = SUB_ROWS * LANE
    sb_start = np.arange(n_sub, dtype=np.int64) * sub_obs
    sb_end = sb_start + sub_obs
    ends = starts_np[1:].astype(np.int64)
    begins = starts_np[:-1].astype(np.int64)
    sb_lo = np.searchsorted(ends, sb_start, side="right")
    sb_hi = np.searchsorted(begins, sb_end, side="left") - 1
    sb_lo = np.clip(sb_lo, 0, num - 1).astype(np.int32)
    sb_hi = np.clip(sb_hi, 0, num - 1).astype(np.int32)
    sb_hi = np.maximum(sb_hi, sb_lo)

    # Pad only the two streamed per-observation arrays; skip when already aligned.
    A_f = A.astype(jnp.float32)
    VPD_f = VPD.astype(jnp.float32)
    if n_pad != N:
        A_f = jnp.pad(A_f, (0, n_pad - N))
        VPD_f = jnp.pad(VPD_f, (0, n_pad - N))
    A_t = A_f.reshape(R_pad, LANE)
    VPD_t = VPD_f.reshape(R_pad, LANE)

    vec_spec = pl.BlockSpec((tile_rows, LANE), lambda i: (i, 0))
    smem_spec = pl.BlockSpec(memory_space=pltpu.MemorySpace.SMEM)

    kernel = functools.partial(
        _med_kernel,
        subs_per_tile=subs_per_tile,
        coef=float(1.6 / Ca),
        vpd_scale=float(101.3 / 1000.0),
    )

    out = pl.pallas_call(
        kernel,
        out_shape=jax.ShapeDtypeStruct((R_pad, LANE), jnp.float32),
        grid=(n_tiles,),
        in_specs=[
            smem_spec, smem_spec, smem_spec,   # starts, sb_lo, sb_hi (int32)
            smem_spec, smem_spec,              # gs0, g1 (f32, per-curve)
            vec_spec, vec_spec,                # A, VPD (streamed tiles)
        ],
        out_specs=vec_spec,
        compiler_params=pltpu.CompilerParams(dimension_semantics=("parallel",)),
        cost_estimate=pl.CostEstimate(
            flops=8 * n_pad, transcendentals=n_pad, bytes_accessed=12 * n_pad),
    )(
        jnp.asarray(starts_np),
        jnp.asarray(sb_lo),
        jnp.asarray(sb_hi),
        gs0.astype(jnp.float32),
        g1.astype(jnp.float32),
        A_t,
        VPD_t,
    )

    return out.reshape(-1)[:N]


def _reference(gs0, g1, lengths, A, VPD, Ca=400.0):
    gids = np.repeat(np.arange(len(lengths)), np.asarray(lengths))
    gs0_r = np.asarray(gs0)[gids]
    g1_r = np.asarray(g1)[gids]
    return gs0_r + 1.6 * (1.0 + g1_r / np.sqrt(np.asarray(VPD) / 1000.0 * 101.3)) \
        * np.asarray(A) / Ca


if __name__ == "__main__":
    key = jax.random.PRNGKey(0)
    ks = jax.random.split(key, 10)

    # --- case 1: small, matches MED.__init__ defaults (gs0 = g1 = ones) -----
    num = 4
    lengths = (6, 8, 5, 13)                       # N = 32 observations
    N = sum(lengths)
    A = jax.random.uniform(ks[0], (N,), jnp.float32, 2.0, 20.0)      # assimilation
    VPD = jax.random.uniform(ks[1], (N,), jnp.float32, 0.5, 3.0)     # kPa
    gs0 = jnp.ones((num,), jnp.float32)
    g1 = jnp.ones((num,), jnp.float32)

    gs = jax.block_until_ready(med_forward(gs0, g1, lengths, A, VPD, Ca=400.0))
    ref = _reference(gs0, g1, lengths, A, VPD, Ca=400.0)
    np.testing.assert_allclose(np.asarray(gs), ref, rtol=1e-5, atol=1e-6)

    # --- case 2: multi-tile grid (forced 8-row tiles), curves cross tiles ----
    num2 = 5
    lengths2 = (400, 700, 250, 900, 750)          # N = 3000
    N2 = sum(lengths2)
    A2 = jax.random.uniform(ks[2], (N2,), jnp.float32, 2.0, 20.0)
    VPD2 = jax.random.uniform(ks[3], (N2,), jnp.float32, 0.5, 3.0)
    gs0_2 = jax.random.uniform(ks[4], (num2,), jnp.float32, 0.01, 0.1)
    g1_2 = jax.random.uniform(ks[5], (num2,), jnp.float32, 1.0, 5.0)

    gs2 = jax.block_until_ready(
        med_forward(gs0_2, g1_2, lengths2, A2, VPD2, Ca=400.0, tile_rows=8))
    ref2 = _reference(gs0_2, g1_2, lengths2, A2, VPD2, Ca=400.0)
    np.testing.assert_allclose(np.asarray(gs2), ref2, rtol=1e-5, atol=1e-6)

    # --- case 3: default tiling, many short curves, several sub-blocks/tile --
    lengths3 = tuple(int(80 + 13 * (k % 7)) for k in range(40))       # N ~ 4.4k
    num3 = len(lengths3)
    N3 = sum(lengths3)
    A3 = jax.random.uniform(ks[6], (N3,), jnp.float32, 2.0, 20.0)
    VPD3 = jax.random.uniform(ks[7], (N3,), jnp.float32, 0.5, 3.0)
    gs0_3 = jax.random.uniform(ks[8], (num3,), jnp.float32, 0.01, 0.1)
    g1_3 = jax.random.uniform(ks[9], (num3,), jnp.float32, 1.0, 5.0)

    gs3 = jax.block_until_ready(
        med_forward(gs0_3, g1_3, lengths3, A3, VPD3, Ca=400.0))
    ref3 = _reference(gs0_3, g1_3, lengths3, A3, VPD3, Ca=400.0)
    np.testing.assert_allclose(np.asarray(gs3), ref3, rtol=1e-5, atol=1e-6)

    print("KERNEL_OK")
</pallas_src>

<mosaic_0001>
module attributes {stable_mosaic.version = 11 : i64} {
  func.func @_med_kernel(%arg0: i32, %arg1: memref<5xi32, #tpu.memory_space<smem>>, %arg2: memref<1xi32, #tpu.memory_space<smem>>, %arg3: memref<1xi32, #tpu.memory_space<smem>>, %arg4: memref<4xf32, #tpu.memory_space<smem>>, %arg5: memref<4xf32, #tpu.memory_space<smem>>, %arg6: memref<8x128xf32, #tpu.memory_space<vmem>>, %arg7: memref<8x128xf32, #tpu.memory_space<vmem>>, %arg8: memref<8x128xf32, #tpu.memory_space<vmem>>) attributes {dimension_semantics = [#tpu.dimension_semantics<parallel>], iteration_bounds = array<i64: 1>, scalar_prefetch = 0 : i64, scratch_operands = 0 : i64, tpu.core_type = #tpu.core_type<tc>, window_params = [{transform_indices = @transform_0, window_bounds = array<i64: 5>}, {transform_indices = @transform_1, window_bounds = array<i64: 1>}, {transform_indices = @transform_2, window_bounds = array<i64: 1>}, {transform_indices = @transform_3, window_bounds = array<i64: 4>}, {transform_indices = @transform_4, window_bounds = array<i64: 4>}, {transform_indices = @transform_5, window_bounds = array<i64: 8, 128>}, {transform_indices = @transform_6, window_bounds = array<i64: 8, 128>}, {transform_indices = @transform_7, window_bounds = array<i64: 8, 128>}]} {
    %0 = tpu.iota {dimensions = array<i32: 0>} : vector<8x128xi32>
    %1 = tpu.iota {dimensions = array<i32: 1>} : vector<8x128xi32>
    %c0_i32 = arith.constant 0 : i32
    %c1_i32 = arith.constant 1 : i32
    %2 = arith.muli %c0_i32, %c1_i32 : i32
    %c0_i32_0 = arith.constant 0 : i32
    %3 = arith.addi %c0_i32_0, %2 : i32
    %c8_i32 = arith.constant 8 : i32
    %4 = arith.muli %3, %c8_i32 : i32
    %5 = tpu.assume_multiple %4, 8 : i32
    %c1_i32_1 = arith.constant 1 : i32
    %6 = arith.muli %arg0, %c1_i32_1 : i32
    %7 = arith.addi %6, %3 : i32
    %c1024_i32 = arith.constant 1024 : i32
    %8 = arith.muli %7, %c1024_i32 : i32
    %c128_i32 = arith.constant 128 : i32
    %9 = vector.broadcast %c128_i32 : i32 to vector<8x128xi32>
    %10 = arith.muli %0, %9 : vector<8x128xi32>
    %11 = vector.broadcast %8 : i32 to vector<8x128xi32>
    %12 = arith.addi %11, %10 : vector<8x128xi32>
    %13 = arith.addi %12, %1 : vector<8x128xi32>
    %14 = arith.index_cast %5 : i32 to index
    %c0 = arith.constant 0 : index
    %15 = vector.load %arg6[%14, %c0] : memref<8x128xf32, #tpu.memory_space<vmem>>, vector<8x128xf32>
    %16 = arith.index_cast %5 : i32 to index
    %c0_2 = arith.constant 0 : index
    %17 = vector.load %arg7[%16, %c0_2] : memref<8x128xf32, #tpu.memory_space<vmem>>, vector<8x128xf32>
    %cst = arith.constant 4.000000e-03 : f32
    %18 = vector.broadcast %cst : f32 to vector<8x128xf32>
    %19 = arith.mulf %15, %18 : vector<8x128xf32>
    %cst_3 = arith.constant 1.013000e-01 : f32
    %20 = vector.broadcast %cst_3 : f32 to vector<8x128xf32>
    %21 = arith.mulf %17, %20 : vector<8x128xf32>
    %cst_4 = arith.constant 1.000000e-30 : f32
    %22 = vector.broadcast %cst_4 : f32 to vector<8x128xf32>
    %23 = arith.maximumf %21, %22 : vector<8x128xf32>
    %24 = math.rsqrt %23 : vector<8x128xf32>
    %25 = arith.mulf %24, %19 : vector<8x128xf32>
    %26 = arith.index_cast %7 : i32 to index
    %27 = memref.load %arg2[%26] : memref<1xi32, #tpu.memory_space<smem>>
    %28 = arith.index_cast %7 : i32 to index
    %29 = memref.load %arg3[%28] : memref<1xi32, #tpu.memory_space<smem>>
    %30 = arith.index_cast %27 : i32 to index
    %31 = memref.load %arg4[%30] : memref<4xf32, #tpu.memory_space<smem>>
    %32 = arith.index_cast %27 : i32 to index
    %33 = memref.load %arg5[%32] : memref<4xf32, #tpu.memory_space<smem>>
    %34 = vector.broadcast %33 : f32 to vector<8x128xf32>
    %35 = arith.mulf %34, %25 : vector<8x128xf32>
    %36 = vector.broadcast %31 : f32 to vector<8x128xf32>
    %37 = arith.addf %36, %35 : vector<8x128xf32>
    %38 = arith.subi %29, %27 : i32
    %c0_i32_5 = arith.constant 0 : i32
    %39 = arith.subi %38, %c0_i32_5 : i32
    %40 = arith.addi %c0_i32_5, %39 : i32
    %c1_i32_6 = arith.constant 1 : i32
    %41 = scf.for %arg9 = %c0_i32_5 to %40 step %c1_i32_6 iter_args(%arg10 = %37) -> (vector<8x128xf32>)  : i32 {
      %c1_i32_9 = arith.constant 1 : i32
      %45 = arith.addi %27, %c1_i32_9 : i32
      %46 = arith.addi %45, %arg9 : i32
      %47 = arith.index_cast %46 : i32 to index
      %48 = memref.load %arg1[%47] : memref<5xi32, #tpu.memory_space<smem>>
      %49 = vector.broadcast %48 : i32 to vector<8x128xi32>
      %50 = arith.cmpi sge, %13, %49 : vector<8x128xi32>
      %51 = arith.index_cast %46 : i32 to index
      %52 = memref.load %arg4[%51] : memref<4xf32, #tpu.memory_space<smem>>
      %53 = arith.index_cast %46 : i32 to index
      %54 = memref.load %arg5[%53] : memref<4xf32, #tpu.memory_space<smem>>
      %55 = vector.broadcast %54 : f32 to vector<8x128xf32>
      %56 = arith.mulf %55, %25 : vector<8x128xf32>
      %57 = vector.broadcast %52 : f32 to vector<8x128xf32>
      %58 = arith.addf %57, %56 : vector<8x128xf32>
      %59 = arith.select %50, %58, %arg10 : vector<8x128xi1>, vector<8x128xf32>
      scf.yield %59 : vector<8x128xf32>
    }
    %42 = arith.addf %41, %19 : vector<8x128xf32>
    %43 = arith.index_cast %5 : i32 to index
    %c0_7 = arith.constant 0 : index
    %44 = vector.load %arg8[%43, %c0_7] : memref<8x128xf32, #tpu.memory_space<vmem>>, vector<8x128xf32>
    tpu.vector_store %arg8[%43, %c0_7], %42 {strides = array<i32>} : memref<8x128xf32, #tpu.memory_space<vmem>>, vector<8x128xf32>,
    %c1_i32_8 = arith.constant 1 : i32
    return
  }
  func.func @transform_0(%arg0: i32) -> i32 {
    %c0_i32 = arith.constant 0 : i32
    %c0_i32_0 = arith.constant 0 : i32
    return %c0_i32 : i32
  }
  func.func @transform_1(%arg0: i32) -> i32 {
    %c0_i32 = arith.constant 0 : i32
    %c0_i32_0 = arith.constant 0 : i32
    return %c0_i32 : i32
  }
  func.func @transform_2(%arg0: i32) -> i32 {
    %c0_i32 = arith.constant 0 : i32
    %c0_i32_0 = arith.constant 0 : i32
    return %c0_i32 : i32
  }
  func.func @transform_3(%arg0: i32) -> i32 {
    %c0_i32 = arith.constant 0 : i32
    %c0_i32_0 = arith.constant 0 : i32
    return %c0_i32 : i32
  }
  func.func @transform_4(%arg0: i32) -> i32 {
    %c0_i32 = arith.constant 0 : i32
    %c0_i32_0 = arith.constant 0 : i32
    return %c0_i32 : i32
  }
  func.func @transform_5(%arg0: i32) -> (i32, i32) {
    %c0_i32 = arith.constant 0 : i32
    %c0_i32_0 = arith.constant 0 : i32
    return %arg0, %c0_i32 : i32, i32
  }
  func.func @transform_6(%arg0: i32) -> (i32, i32) {
    %c0_i32 = arith.constant 0 : i32
    %c0_i32_0 = arith.constant 0 : i32
    return %arg0, %c0_i32 : i32, i32
  }
  func.func @transform_7(%arg0: i32) -> (i32, i32) {
    %c0_i32 = arith.constant 0 : i32
    %c0_i32_0 = arith.constant 0 : i32
    return %arg0, %c0_i32 : i32, i32
  }
}

</mosaic_0001>

<llo_original>
// kernel: tpu_custom_call.1
$region0: #{tpu_custom_call.1}
  #allocation0 [shape = 'u32[]', space=smem, size = 0x4, offset = 0x4, fixed_abs, tag = 'smem constant byte address 0x4 - core index']
  #allocation1 [shape = 'u32[144,128]{1,0:T(1,128)}', space=vmem, size = 0x12000, scoped, tag = 'internal scratch']
  #allocation2 [shape = 's32[1]{0:T(128)S(6)}', space=smem, size = 0x200, scoped, tag = 'scoped memory for tpu_custom_call.1']
  #allocation3 [shape = 's32[1]{0:T(128)S(6)}', space=smem, size = 0x200, scoped, tag = 'scoped memory for tpu_custom_call.1']
  %s0 = inlined_call_operand.vmem [shape: s32[5], index: 0, kind: input, shape index: {}]
  %s1 = inlined_call_operand.<no memory space> [shape: s32[1], index: 1, kind: input, shape index: {}]
  %s2 = inlined_call_operand.<no memory space> [shape: s32[1], index: 2, kind: input, shape index: {}]
  %s3 = inlined_call_operand.vmem [shape: f32[4], index: 3, kind: input, shape index: {}]
  %s4 = inlined_call_operand.hbm [shape: f32[4], index: 4, kind: input, shape index: {}]
  %s5 = inlined_call_operand.vmem [shape: f32[8,128], index: 5, kind: input, shape index: {}]
  %s6 = inlined_call_operand.vmem [shape: f32[8,128], index: 6, kind: input, shape index: {}]
  %s7 = inlined_call_operand.hbm [shape: f32[8,128], index: 7, kind: output, shape index: {}]
  %s8 = sld [smem:[#allocation0]]
  $region57: #{tpu_custom_call.1} parent=0
    _
  %s10 = ssub.s32 1, %s8
  %s11 = scalar_select 0, %s10, %s8
  %12 = sst [smem:[#allocation2]] %s1
  %13 = sst [smem:[#allocation3]] %s2
  $region1: #{tpu_custom_call.1} parent=0
    #allocation4 [shape = 'u8[512]{0}', space=smem, size = 0x200, scoped, tag = 'input window, operand 0, single buffered']
    #allocation5 [shape = 's32[1]{0}', space=sflag, size = 0x4, scoped, tag = 'scoped memory for tpu_custom_call.1']
    #allocation6 [shape = 's32[1]{0}', space=sflag, size = 0x4, scoped, tag = 'scoped memory for tpu_custom_call.1']
    #allocation7 [shape = 's32[1]{0}', space=sflag, size = 0x4, scoped, tag = 'scoped memory for tpu_custom_call.1']
    #allocation8 [shape = 'u8[512]{0}', space=smem, size = 0x200, scoped, tag = 'input window, operand 3, single buffered']
    #allocation9 [shape = 's32[1]{0}', space=sflag, size = 0x4, scoped, tag = 'scoped memory for tpu_custom_call.1']
    #allocation10 [shape = 'u8[512]{0}', space=smem, size = 0x200, scoped, tag = 'input window, operand 4, single buffered']
    #allocation11 [shape = 'u8[4096]{0}', space=vmem, size = 0x1000, scoped, tag = 'output window, operand 0, single buffered']
    %14 = vsyncpa [#allocation7], 0
    %15 = vsyncpa [#allocation9], 0
    %16 = vsyncpa [#allocation6], 0
    %17 = vsyncpa [#allocation5], 0
    // Predicated region
    $region2: #{tpu_custom_call.1} parent=1 // pred_check
      _
    $region3: #{tpu_custom_call.1} parent=1 // pred_check_branch
      %19 = sbr.rel (0) target = $region5
    $region4: #{tpu_custom_call.1} parent=1 // pred_region
      %s21 = ssub.s32 16, 16
      %22 = vsyncadd [#allocation7], %s21
      %s24 = sshll.u32 %s0, 4
      %s25 = int_to_ptr.vmem [resolvable:$true] %s24
      %27 = dma.vmem_to_smem %s25, 16, [#allocation4], [#allocation7]
    $region5: #{tpu_custom_call.1} parent=1 // pred_fallthru
      _
    // Predicated region
    $region6: #{tpu_custom_call.1} parent=1 // pred_check
      _
    $region7: #{tpu_custom_call.1} parent=1 // pred_check_branch
      %29 = sbr.rel (0) target = $region9
    $region8: #{tpu_custom_call.1} parent=1 // pred_region
      _
    $region9: #{tpu_custom_call.1} parent=1 // pred_fallthru
      _
    // Predicated region
    $region10: #{tpu_custom_call.1} parent=1 // pred_check
      _
    $region11: #{tpu_custom_call.1} parent=1 // pred_check_branch
      %31 = sbr.rel (0) target = $region13
    $region12: #{tpu_custom_call.1} parent=1 // pred_region
      _
    $region13: #{tpu_custom_call.1} parent=1 // pred_fallthru
      _
    // Predicated region
    $region14: #{tpu_custom_call.1} parent=1 // pred_check
      _
    $region15: #{tpu_custom_call.1} parent=1 // pred_check_branch
      %33 = sbr.rel (0) target = $region17
    $region16: #{tpu_custom_call.1} parent=1 // pred_region
      %s35 = ssub.s32 16, 16
      %36 = vsyncadd [#allocation9], %s35
      %s38 = sshll.u32 %s3, 4
      %s39 = int_to_ptr.vmem [resolvable:$true] %s38
      %41 = dma.vmem_to_smem %s39, 16, [#allocation8], [#allocation9]
    $region17: #{tpu_custom_call.1} parent=1 // pred_fallthru
      _
    // Predicated region
    $region18: #{tpu_custom_call.1} parent=1 // pred_check
      _
    $region19: #{tpu_custom_call.1} parent=1 // pred_check_branch
      %43 = sbr.rel (0) target = $region21
    $region20: #{tpu_custom_call.1} parent=1 // pred_region
      %s45 = ssub.s32 16, 16
      %46 = vsyncadd [#allocation6], %s45
      %49 = dma.hbm_to_smem %s4, 16, [#allocation10], [#allocation6]
    $region21: #{tpu_custom_call.1} parent=1 // pred_fallthru
      _
    // Predicated region
    $region22: #{tpu_custom_call.1} parent=1 // pred_check
      _
    $region23: #{tpu_custom_call.1} parent=1 // pred_check_branch
      %51 = sbr.rel (0) target = $region25
    $region24: #{tpu_custom_call.1} parent=1 // pred_region
      _
    $region25: #{tpu_custom_call.1} parent=1 // pred_fallthru
      _
    // Predicated region
    $region26: #{tpu_custom_call.1} parent=1 // pred_check
      _
    $region27: #{tpu_custom_call.1} parent=1 // pred_check_branch
      %53 = sbr.rel (0) target = $region29
    $region28: #{tpu_custom_call.1} parent=1 // pred_region
      _
    $region29: #{tpu_custom_call.1} parent=1 // pred_fallthru
      _
    // Predicated region
    $region30: #{tpu_custom_call.1} parent=1 // pred_check
      _
    $region31: #{tpu_custom_call.1} parent=1 // pred_check_branch
      %55 = sbr.rel (0) target = $region33
    $region32: #{tpu_custom_call.1} parent=1 // pred_region
      %56 = dma.done [#allocation7], 16
    $region33: #{tpu_custom_call.1} parent=1 // pred_fallthru
      _
    // Predicated region
    $region34: #{tpu_custom_call.1} parent=1 // pred_check
      _
    $region35: #{tpu_custom_call.1} parent=1 // pred_check_branch
      %58 = sbr.rel (0) target = $region37
    $region36: #{tpu_custom_call.1} parent=1 // pred_region
      %59 = dma.done [#allocation9], 16
    $region37: #{tpu_custom_call.1} parent=1 // pred_fallthru
      _
    // Predicated region
    $region38: #{tpu_custom_call.1} parent=1 // pred_check
      _
    $region39: #{tpu_custom_call.1} parent=1 // pred_check_branch
      %61 = sbr.rel (0) target = $region41
    $region40: #{tpu_custom_call.1} parent=1 // pred_region
      %62 = dma.done [#allocation6], 16
    $region41: #{tpu_custom_call.1} parent=1 // pred_fallthru
      _
    %63 = sfence
    %v64 = vlaneseq
    %v65 = vshrl.u32 %v64, 7
    %v66 = vlaneseq
    %v67 = vand.u32 %v66, 127
    %s68 = smul.u32 0, 1024
    %v69 = vmul.u32 %v65, 128
    %v70 = vstv %s68
    %v71 = vadd.s32 %v70, %v69
    %v72 = vadd.s32 %v71, %v67
    %v73 = vld [vmem:[%s5] sm:$0xff]
    %v74 = vld [vmem:[%s6] sm:$0xff]
    %v75 = vmul.f32 %v73, 0.004
    %v76 = vmul.f32 %v74, 0.1013
    %v77 = vmax.f32 %v76, 1e-30
    %v78 = vrsqrt.pop %v77
    %v79 = vmul.f32 %v78, %v75
    %s80 = sld [smem:[#allocation2]]
    %s81 = sld [smem:[#allocation3]]
    %s82 = sld [smem:[#allocation8 + %s80]]
    %s83 = sld [smem:[#allocation10 + %s80]]
    %v84 = vstv %s83
    %v85 = vmul.f32 %v84, %v79
    %v86 = vstv %s82
    %v87 = vadd.f32 %v86, %v85
    %s88 = ssub.s32 %s81, %s80
    // While loop
    $region42: #{tpu_custom_call.1} parent=1 // loop_pre_header
      _
    $region43: #{tpu_custom_call.1} parent=1 // loop_header
      %s90 = sphi 0, %s92
      %p91 = scmp.ge.s32.totalorder %s90, %s88
      %v95 = vphi %v87, %v107
    $region44: #{tpu_custom_call.1} parent=1 // loop_header_branch
      %94 = sbr.rel (%p91) target = $region48
    $region45: #{tpu_custom_call.1} parent=1 // loop_body
      %s96 = sadd.s32 %s80, 1
      %s97 = sadd.s32 %s96, %s90
      %s98 = sld [smem:[#allocation4 + %s97]]
      %v99 = vstv %s98
      %vm100 = vcmp.ge.s32.totalorder %v72, %v99
      %s101 = sld [smem:[#allocation8 + %s97]]
      %s102 = sld [smem:[#allocation10 + %s97]]
      %v103 = vstv %s102
      %v104 = vmul.f32 %v103, %v79
      %v105 = vstv %s101
      %v106 = vadd.f32 %v105, %v104
      %v107 = vsel %vm100, %v106, %v95
    $region46: #{tpu_custom_call.1} parent=1 // loop_footer
      %s92 = sadd.s32 %s90, 1
    $region47: #{tpu_custom_call.1} parent=1 // loop_footer_branch
      %89 = sbr.rel target = $region43
    $region48: #{tpu_custom_call.1} parent=1 // loop_exit
      _
    %v108 = vadd.f32 %v95, %v75
    %109 = vst [vmem:[#allocation11] sm:$0xff] %v108
    // Predicated region
    $region49: #{tpu_custom_call.1} parent=1 // pred_check
      _
    $region50: #{tpu_custom_call.1} parent=1 // pred_check_branch
      %111 = sbr.rel (0) target = $region52
    $region51: #{tpu_custom_call.1} parent=1 // pred_region
      %s113 = ssub.s32 128, 128
      %114 = vsyncadd [#allocation5], %s113
      %s116 = sshll.u32 [#allocation11], 4
      %s117 = int_to_ptr.vmem [resolvable:$true] %s116
      %119 = dma.vmem_to_hbm [thread:$0]  %s117, 128, %s7, [#allocation5]
    $region52: #{tpu_custom_call.1} parent=1 // pred_fallthru
      _
    // Predicated region
    $region53: #{tpu_custom_call.1} parent=1 // pred_check
      _
    $region54: #{tpu_custom_call.1} parent=1 // pred_check_branch
      %121 = sbr.rel (0) target = $region56
    $region55: #{tpu_custom_call.1} parent=1 // pred_region
      %122 = dma.done [#allocation5], 128
    $region56: #{tpu_custom_call.1} parent=1 // pred_fallthru
      _
    %123 = vsyncpa [#allocation5], 1
    %124 = vsyncpa [#allocation6], 1
    %125 = vsyncpa [#allocation7], 1
    %126 = vsyncpa [#allocation9], 1

</llo_original>
